<compile_context>
chip_gen: v7x
topology: tpu7x:2x2x1
jax: 0.10.0
libtpu: 0.0.40
codegen_flags: <defaults>
</compile_context>

<pallas_src>
import jax
import jax.numpy as jnp
from jax.experimental import pallas as pl
from jax.experimental.pallas import tpu as pltpu


# ------------------------- Fused LSTM_Net kernel ----------------------------
def lstm_net_kernel(x_ref, wb_ref, lwb_ref, out_ref):
    """Full forward pass: LSTM recurrence + Linear readout.

    x_ref:   (S, D)        input sequence (batch squeezed; batch == 1)
    wb_ref:  (D+H+1, 4H)   packed [W_ih^T ; W_hh^T ; (b_ih+b_hh)] with g-gate
                           columns pre-scaled by 2 (tanh(x) = 2*sigmoid(2x) - 1)
    lwb_ref: (H+1, O)      packed [lin_W^T ; lin_b]
    out_ref: (S, O)        full readout (the [0:-1] drop happens in the wrapper)
    """
    S, D = x_ref.shape
    H = wb_ref.shape[0] - D - 1
    O = lwb_ref.shape[1]

    w_ih_t = wb_ref[0:D, :]                    # (D, 4H)
    w_hh_t = wb_ref[D:D + H, :]                # (H, 4H)
    bias = wb_ref[D + H:D + H + 1, :]          # (1, 4H)

    # Hoisted input projection (+ bias folded in): one MXU matmul, off the
    # serial recurrence chain.  (S, 4H) fits in a single f32 vreg at S=8, H=32.
    xw = jnp.dot(x_ref[...], w_ih_t, preferred_element_type=jnp.float32) + bias

    h = jnp.zeros((1, H), jnp.float32)
    c = jnp.zeros((1, H), jnp.float32)
    hs = []
    # Statically unrolled recurrence; S is small and known at trace time.
    for t in range(S):
        gates = xw[t:t + 1, :] + jnp.dot(h, w_hh_t,
                                         preferred_element_type=jnp.float32)
        sig = jax.nn.sigmoid(gates)            # EUP push #1 (full 4H-wide vreg)
        i_g = sig[:, 0 * H:1 * H]
        f_g = sig[:, 1 * H:2 * H]
        g_g = 2.0 * sig[:, 2 * H:3 * H] - 1.0  # tanh via pre-scaled g cols (VPU)
        o_g = sig[:, 3 * H:4 * H]
        c = f_g * c + i_g * g_g
        h = o_g * jnp.tanh(c)                  # EUP push #2
        hs.append(h)

    hist = jnp.concatenate(hs, axis=0)         # (S, H), lives entirely in vregs

    lin_w_t = lwb_ref[0:H, :]                  # (H, O)
    lin_b = lwb_ref[H:H + 1, :]                # (1, O)
    y = jnp.dot(hist, lin_w_t, preferred_element_type=jnp.float32) + lin_b
    out_ref[...] = y.astype(out_ref.dtype)     # clean full (S, O) store


# --------------------------- Parameter prep (once) ---------------------------
def prepare_params(raw):
    """Hoisted out of the forward path: transposes / bias sum / g-gate scaling /
    packing into two arrays, done exactly once."""
    H = raw["w_hh"].shape[1]
    O = raw["lin_w"].shape[0]

    w_ih_t = jnp.asarray(raw["w_ih"].T, jnp.float32)                 # (D, 4H)
    w_hh_t = jnp.asarray(raw["w_hh"].T, jnp.float32)                 # (H, 4H)
    bias = (raw["b_ih"] + raw["b_hh"]).reshape(1, 4 * H).astype(jnp.float32)

    # Pre-scale the g-gate (columns 2H:3H) by 2 so the kernel can recover
    # tanh(x) = 2*sigmoid(2x) - 1 from a single full-width sigmoid.
    gscale = jnp.concatenate(
        [jnp.ones((1, 2 * H), jnp.float32),
         jnp.full((1, H), 2.0, jnp.float32),
         jnp.ones((1, H), jnp.float32)], axis=1)
    w_ih_t = w_ih_t * gscale
    w_hh_t = w_hh_t * gscale
    bias = bias * gscale

    wb = jnp.concatenate([w_ih_t, w_hh_t, bias], axis=0)             # (D+H+1, 4H)
    lwb = jnp.concatenate(
        [jnp.asarray(raw["lin_w"].T, jnp.float32),
         raw["lin_b"].reshape(1, O).astype(jnp.float32)], axis=0)    # (H+1, O)
    return {"wb": wb, "lwb": lwb}


# ------------------------------- Forward ------------------------------------
@jax.jit
def lstm_net_forward(x, params):
    """Pallas implementation of LSTM_Net.forward.  x: (S, 1, in_dim) -> (S-1, out_dim)."""
    S, B, D = x.shape
    assert B == 1, "LSTM_Net.forward only type-checks with batch == 1"
    H = params["wb"].shape[0] - D - 1
    O = params["lwb"].shape[1]
    x2 = x.reshape(S, D)  # metadata-only squeeze of the batch=1 axis

    # Advisory cost hint so XLA schedules around this tiny custom call sensibly.
    flops = int(
        2 * S * D * 4 * H + S * 4 * H            # hoisted input projection + bias
        + S * (2 * H * 4 * H + 12 * H)           # recurrent matmul + gate math
        + 2 * S * H * O + S * O)                 # readout
    transcendentals = int(S * (4 * H + H))       # 1 sigmoid(4H) + 1 tanh(H) per step
    bytes_accessed = int(4 * (x2.size + params["wb"].size + params["lwb"].size + S * O))

    y = pl.pallas_call(
        lstm_net_kernel,
        out_shape=jax.ShapeDtypeStruct((S, O), jnp.float32),
        in_specs=[pl.BlockSpec(memory_space=pltpu.MemorySpace.VMEM)] * 3,
        out_specs=pl.BlockSpec(memory_space=pltpu.MemorySpace.VMEM),
        cost_estimate=pl.CostEstimate(
            flops=flops,
            transcendentals=transcendentals,
            bytes_accessed=bytes_accessed,
        ),
    )(x2, params["wb"], params["lwb"])

    return y[:-1]                                # the module's [0:-1], free in XLA


# ------------------------------ Reference ------------------------------------
def lstm_net_reference(x, raw):
    S, B, D = x.shape
    H = raw["w_hh"].shape[1]
    w_ih_t, w_hh_t = raw["w_ih"].T, raw["w_hh"].T
    bias = raw["b_ih"] + raw["b_hh"]

    def step(carry, x_t):
        h, c = carry
        gates = x_t @ w_ih_t + h @ w_hh_t + bias
        i = jax.nn.sigmoid(gates[:, 0 * H:1 * H])
        f = jax.nn.sigmoid(gates[:, 1 * H:2 * H])
        g = jnp.tanh(gates[:, 2 * H:3 * H])
        o = jax.nn.sigmoid(gates[:, 3 * H:4 * H])
        c = f * c + i * g
        h = o * jnp.tanh(c)
        return (h, c), h

    h0 = jnp.zeros((B, H), jnp.float32)
    _, hs = jax.lax.scan(step, (h0, h0), x)
    flat = hs.reshape(S, -1)
    y = flat @ raw["lin_w"].T + raw["lin_b"]
    return y[0:-1]


# --------------------------------- Main ---------------------------------------
if __name__ == "__main__":
    SEQ, BATCH, IN_DIM, HIDDEN, OUT_DIM = 8, 1, 4, 32, 4

    key = jax.random.PRNGKey(0)
    ks = jax.random.split(key, 7)
    k = 1.0 / jnp.sqrt(HIDDEN)
    raw_params = {
        "w_ih": jax.random.uniform(ks[0], (4 * HIDDEN, IN_DIM), jnp.float32, -k, k),
        "w_hh": jax.random.uniform(ks[1], (4 * HIDDEN, HIDDEN), jnp.float32, -k, k),
        "b_ih": jax.random.uniform(ks[2], (4 * HIDDEN,), jnp.float32, -k, k),
        "b_hh": jax.random.uniform(ks[3], (4 * HIDDEN,), jnp.float32, -k, k),
        "lin_w": jax.random.uniform(ks[4], (OUT_DIM, HIDDEN), jnp.float32, -k, k),
        "lin_b": jax.random.uniform(ks[5], (OUT_DIM,), jnp.float32, -k, k),
    }
    x = jax.random.normal(ks[6], (SEQ, BATCH, IN_DIM), jnp.float32)

    params = jax.tree.map(jax.block_until_ready, prepare_params(raw_params))  # once

    out = jax.block_until_ready(lstm_net_forward(x, params))
    ref = jax.block_until_ready(lstm_net_reference(x, raw_params))

    assert out.shape == (SEQ - 1, OUT_DIM), out.shape
    assert jnp.allclose(out, ref, atol=1e-5, rtol=1e-5), "mismatch vs reference"
    print("KERNEL_OK")
</pallas_src>

<mosaic_0001>
module attributes {stable_mosaic.version = 11 : i64} {
  func.func @lstm_net_kernel(%arg0: memref<8x4xf32, #tpu.memory_space<vmem>>, %arg1: memref<37x128xf32, #tpu.memory_space<vmem>>, %arg2: memref<33x4xf32, #tpu.memory_space<vmem>>, %arg3: memref<8x4xf32, #tpu.memory_space<vmem>>) attributes {dimension_semantics = [], scalar_prefetch = 0 : i64, scratch_operands = 0 : i64, tpu.core_type = #tpu.core_type<tc>} {
    %c0 = arith.constant 0 : index
    %c0_0 = arith.constant 0 : index
    %0 = vector.load %arg1[%c0, %c0_0] : memref<37x128xf32, #tpu.memory_space<vmem>>, vector<4x128xf32>
    %c4 = arith.constant 4 : index
    %c0_1 = arith.constant 0 : index
    %1 = vector.load %arg1[%c4, %c0_1] : memref<37x128xf32, #tpu.memory_space<vmem>>, vector<32x128xf32>
    %c36 = arith.constant 36 : index
    %c0_2 = arith.constant 0 : index
    %2 = vector.load %arg1[%c36, %c0_2] : memref<37x128xf32, #tpu.memory_space<vmem>>, vector<1x128xf32>
    %c0_3 = arith.constant 0 : index
    %c0_4 = arith.constant 0 : index
    %3 = vector.load %arg0[%c0_3, %c0_4] : memref<8x4xf32, #tpu.memory_space<vmem>>, vector<8x4xf32>
    %cst = arith.constant dense<0.000000e+00> : vector<8x128xf32>
    %4 = tpu.matmul %3, %0, %cst {dimension_numbers = #tpu.dot_dimension_numbers<[1], [0], [0], [1], [0, 0, 1, 1], [], []>} : vector<8x4xf32>, vector<4x128xf32>, vector<8x128xf32> -> vector<8x128xf32>
    %5 = vector.broadcast %2 : vector<1x128xf32> to vector<8x128xf32>
    %6 = arith.addf %4, %5 : vector<8x128xf32>
    %cst_5 = arith.constant 0.000000e+00 : f32
    %7 = vector.broadcast %cst_5 : f32 to vector<1x32xf32>
    %cst_6 = arith.constant 0.000000e+00 : f32
    %8 = vector.broadcast %cst_6 : f32 to vector<1x32xf32>
    %9 = vector.extract_strided_slice %6 {offsets = [0, 0], sizes = [1, 128], strides = [1, 1]} : vector<8x128xf32> to vector<1x128xf32>
    %cst_7 = arith.constant dense<0.000000e+00> : vector<1x128xf32>
    %10 = tpu.matmul %7, %1, %cst_7 {dimension_numbers = #tpu.dot_dimension_numbers<[1], [0], [0], [1], [0, 0, 1, 1], [], []>} : vector<1x32xf32>, vector<32x128xf32>, vector<1x128xf32> -> vector<1x128xf32>
    %11 = arith.addf %9, %10 : vector<1x128xf32>
    %12 = arith.negf %11 : vector<1x128xf32>
    %13 = math.exp %12 : vector<1x128xf32>
    %cst_8 = arith.constant 1.000000e+00 : f32
    %14 = vector.broadcast %cst_8 : f32 to vector<1x128xf32>
    %15 = arith.addf %14, %13 : vector<1x128xf32>
    %16 = arith.divf %14, %15 : vector<1x128xf32>
    %17 = vector.extract_strided_slice %16 {offsets = [0, 0], sizes = [1, 32], strides = [1, 1]} : vector<1x128xf32> to vector<1x32xf32>
    %18 = vector.extract_strided_slice %16 {offsets = [0, 32], sizes = [1, 32], strides = [1, 1]} : vector<1x128xf32> to vector<1x32xf32>
    %19 = vector.extract_strided_slice %16 {offsets = [0, 64], sizes = [1, 32], strides = [1, 1]} : vector<1x128xf32> to vector<1x32xf32>
    %cst_9 = arith.constant 2.000000e+00 : f32
    %20 = vector.broadcast %cst_9 : f32 to vector<1x32xf32>
    %21 = arith.mulf %20, %19 : vector<1x32xf32>
    %cst_10 = arith.constant 1.000000e+00 : f32
    %22 = vector.broadcast %cst_10 : f32 to vector<1x32xf32>
    %23 = arith.subf %21, %22 : vector<1x32xf32>
    %24 = vector.extract_strided_slice %16 {offsets = [0, 96], sizes = [1, 32], strides = [1, 1]} : vector<1x128xf32> to vector<1x32xf32>
    %25 = arith.mulf %18, %8 : vector<1x32xf32>
    %26 = arith.mulf %17, %23 : vector<1x32xf32>
    %27 = arith.addf %25, %26 : vector<1x32xf32>
    %28 = math.tanh %27 : vector<1x32xf32>
    %29 = arith.mulf %24, %28 : vector<1x32xf32>
    %30 = vector.extract_strided_slice %6 {offsets = [1, 0], sizes = [1, 128], strides = [1, 1]} : vector<8x128xf32> to vector<1x128xf32>
    %cst_11 = arith.constant dense<0.000000e+00> : vector<1x128xf32>
    %31 = tpu.matmul %29, %1, %cst_11 {dimension_numbers = #tpu.dot_dimension_numbers<[1], [0], [0], [1], [0, 0, 1, 1], [], []>} : vector<1x32xf32>, vector<32x128xf32>, vector<1x128xf32> -> vector<1x128xf32>
    %32 = arith.addf %30, %31 : vector<1x128xf32>
    %33 = arith.negf %32 : vector<1x128xf32>
    %34 = math.exp %33 : vector<1x128xf32>
    %cst_12 = arith.constant 1.000000e+00 : f32
    %35 = vector.broadcast %cst_12 : f32 to vector<1x128xf32>
    %36 = arith.addf %35, %34 : vector<1x128xf32>
    %37 = arith.divf %35, %36 : vector<1x128xf32>
    %38 = vector.extract_strided_slice %37 {offsets = [0, 0], sizes = [1, 32], strides = [1, 1]} : vector<1x128xf32> to vector<1x32xf32>
    %39 = vector.extract_strided_slice %37 {offsets = [0, 32], sizes = [1, 32], strides = [1, 1]} : vector<1x128xf32> to vector<1x32xf32>
    %40 = vector.extract_strided_slice %37 {offsets = [0, 64], sizes = [1, 32], strides = [1, 1]} : vector<1x128xf32> to vector<1x32xf32>
    %cst_13 = arith.constant 2.000000e+00 : f32
    %41 = vector.broadcast %cst_13 : f32 to vector<1x32xf32>
    %42 = arith.mulf %41, %40 : vector<1x32xf32>
    %cst_14 = arith.constant 1.000000e+00 : f32
    %43 = vector.broadcast %cst_14 : f32 to vector<1x32xf32>
    %44 = arith.subf %42, %43 : vector<1x32xf32>
    %45 = vector.extract_strided_slice %37 {offsets = [0, 96], sizes = [1, 32], strides = [1, 1]} : vector<1x128xf32> to vector<1x32xf32>
    %46 = arith.mulf %39, %27 : vector<1x32xf32>
    %47 = arith.mulf %38, %44 : vector<1x32xf32>
    %48 = arith.addf %46, %47 : vector<1x32xf32>
    %49 = math.tanh %48 : vector<1x32xf32>
    %50 = arith.mulf %45, %49 : vector<1x32xf32>
    %51 = vector.extract_strided_slice %6 {offsets = [2, 0], sizes = [1, 128], strides = [1, 1]} : vector<8x128xf32> to vector<1x128xf32>
    %cst_15 = arith.constant dense<0.000000e+00> : vector<1x128xf32>
    %52 = tpu.matmul %50, %1, %cst_15 {dimension_numbers = #tpu.dot_dimension_numbers<[1], [0], [0], [1], [0, 0, 1, 1], [], []>} : vector<1x32xf32>, vector<32x128xf32>, vector<1x128xf32> -> vector<1x128xf32>
    %53 = arith.addf %51, %52 : vector<1x128xf32>
    %54 = arith.negf %53 : vector<1x128xf32>
    %55 = math.exp %54 : vector<1x128xf32>
    %cst_16 = arith.constant 1.000000e+00 : f32
    %56 = vector.broadcast %cst_16 : f32 to vector<1x128xf32>
    %57 = arith.addf %56, %55 : vector<1x128xf32>
    %58 = arith.divf %56, %57 : vector<1x128xf32>
    %59 = vector.extract_strided_slice %58 {offsets = [0, 0], sizes = [1, 32], strides = [1, 1]} : vector<1x128xf32> to vector<1x32xf32>
    %60 = vector.extract_strided_slice %58 {offsets = [0, 32], sizes = [1, 32], strides = [1, 1]} : vector<1x128xf32> to vector<1x32xf32>
    %61 = vector.extract_strided_slice %58 {offsets = [0, 64], sizes = [1, 32], strides = [1, 1]} : vector<1x128xf32> to vector<1x32xf32>
    %cst_17 = arith.constant 2.000000e+00 : f32
    %62 = vector.broadcast %cst_17 : f32 to vector<1x32xf32>
    %63 = arith.mulf %62, %61 : vector<1x32xf32>
    %cst_18 = arith.constant 1.000000e+00 : f32
    %64 = vector.broadcast %cst_18 : f32 to vector<1x32xf32>
    %65 = arith.subf %63, %64 : vector<1x32xf32>
    %66 = vector.extract_strided_slice %58 {offsets = [0, 96], sizes = [1, 32], strides = [1, 1]} : vector<1x128xf32> to vector<1x32xf32>
    %67 = arith.mulf %60, %48 : vector<1x32xf32>
    %68 = arith.mulf %59, %65 : vector<1x32xf32>
    %69 = arith.addf %67, %68 : vector<1x32xf32>
    %70 = math.tanh %69 : vector<1x32xf32>
    %71 = arith.mulf %66, %70 : vector<1x32xf32>
    %72 = vector.extract_strided_slice %6 {offsets = [3, 0], sizes = [1, 128], strides = [1, 1]} : vector<8x128xf32> to vector<1x128xf32>
    %cst_19 = arith.constant dense<0.000000e+00> : vector<1x128xf32>
    %73 = tpu.matmul %71, %1, %cst_19 {dimension_numbers = #tpu.dot_dimension_numbers<[1], [0], [0], [1], [0, 0, 1, 1], [], []>} : vector<1x32xf32>, vector<32x128xf32>, vector<1x128xf32> -> vector<1x128xf32>
    %74 = arith.addf %72, %73 : vector<1x128xf32>
    %75 = arith.negf %74 : vector<1x128xf32>
    %76 = math.exp %75 : vector<1x128xf32>
    %cst_20 = arith.constant 1.000000e+00 : f32
    %77 = vector.broadcast %cst_20 : f32 to vector<1x128xf32>
    %78 = arith.addf %77, %76 : vector<1x128xf32>
    %79 = arith.divf %77, %78 : vector<1x128xf32>
    %80 = vector.extract_strided_slice %79 {offsets = [0, 0], sizes = [1, 32], strides = [1, 1]} : vector<1x128xf32> to vector<1x32xf32>
    %81 = vector.extract_strided_slice %79 {offsets = [0, 32], sizes = [1, 32], strides = [1, 1]} : vector<1x128xf32> to vector<1x32xf32>
    %82 = vector.extract_strided_slice %79 {offsets = [0, 64], sizes = [1, 32], strides = [1, 1]} : vector<1x128xf32> to vector<1x32xf32>
    %cst_21 = arith.constant 2.000000e+00 : f32
    %83 = vector.broadcast %cst_21 : f32 to vector<1x32xf32>
    %84 = arith.mulf %83, %82 : vector<1x32xf32>
    %cst_22 = arith.constant 1.000000e+00 : f32
    %85 = vector.broadcast %cst_22 : f32 to vector<1x32xf32>
    %86 = arith.subf %84, %85 : vector<1x32xf32>
    %87 = vector.extract_strided_slice %79 {offsets = [0, 96], sizes = [1, 32], strides = [1, 1]} : vector<1x128xf32> to vector<1x32xf32>
    %88 = arith.mulf %81, %69 : vector<1x32xf32>
    %89 = arith.mulf %80, %86 : vector<1x32xf32>
    %90 = arith.addf %88, %89 : vector<1x32xf32>
    %91 = math.tanh %90 : vector<1x32xf32>
    %92 = arith.mulf %87, %91 : vector<1x32xf32>
    %93 = vector.extract_strided_slice %6 {offsets = [4, 0], sizes = [1, 128], strides = [1, 1]} : vector<8x128xf32> to vector<1x128xf32>
    %cst_23 = arith.constant dense<0.000000e+00> : vector<1x128xf32>
    %94 = tpu.matmul %92, %1, %cst_23 {dimension_numbers = #tpu.dot_dimension_numbers<[1], [0], [0], [1], [0, 0, 1, 1], [], []>} : vector<1x32xf32>, vector<32x128xf32>, vector<1x128xf32> -> vector<1x128xf32>
    %95 = arith.addf %93, %94 : vector<1x128xf32>
    %96 = arith.negf %95 : vector<1x128xf32>
    %97 = math.exp %96 : vector<1x128xf32>
    %cst_24 = arith.constant 1.000000e+00 : f32
    %98 = vector.broadcast %cst_24 : f32 to vector<1x128xf32>
    %99 = arith.addf %98, %97 : vector<1x128xf32>
    %100 = arith.divf %98, %99 : vector<1x128xf32>
    %101 = vector.extract_strided_slice %100 {offsets = [0, 0], sizes = [1, 32], strides = [1, 1]} : vector<1x128xf32> to vector<1x32xf32>
    %102 = vector.extract_strided_slice %100 {offsets = [0, 32], sizes = [1, 32], strides = [1, 1]} : vector<1x128xf32> to vector<1x32xf32>
    %103 = vector.extract_strided_slice %100 {offsets = [0, 64], sizes = [1, 32], strides = [1, 1]} : vector<1x128xf32> to vector<1x32xf32>
    %cst_25 = arith.constant 2.000000e+00 : f32
    %104 = vector.broadcast %cst_25 : f32 to vector<1x32xf32>
    %105 = arith.mulf %104, %103 : vector<1x32xf32>
    %cst_26 = arith.constant 1.000000e+00 : f32
    %106 = vector.broadcast %cst_26 : f32 to vector<1x32xf32>
    %107 = arith.subf %105, %106 : vector<1x32xf32>
    %108 = vector.extract_strided_slice %100 {offsets = [0, 96], sizes = [1, 32], strides = [1, 1]} : vector<1x128xf32> to vector<1x32xf32>
    %109 = arith.mulf %102, %90 : vector<1x32xf32>
    %110 = arith.mulf %101, %107 : vector<1x32xf32>
    %111 = arith.addf %109, %110 : vector<1x32xf32>
    %112 = math.tanh %111 : vector<1x32xf32>
    %113 = arith.mulf %108, %112 : vector<1x32xf32>
    %114 = vector.extract_strided_slice %6 {offsets = [5, 0], sizes = [1, 128], strides = [1, 1]} : vector<8x128xf32> to vector<1x128xf32>
    %cst_27 = arith.constant dense<0.000000e+00> : vector<1x128xf32>
    %115 = tpu.matmul %113, %1, %cst_27 {dimension_numbers = #tpu.dot_dimension_numbers<[1], [0], [0], [1], [0, 0, 1, 1], [], []>} : vector<1x32xf32>, vector<32x128xf32>, vector<1x128xf32> -> vector<1x128xf32>
    %116 = arith.addf %114, %115 : vector<1x128xf32>
    %117 = arith.negf %116 : vector<1x128xf32>
    %118 = math.exp %117 : vector<1x128xf32>
    %cst_28 = arith.constant 1.000000e+00 : f32
    %119 = vector.broadcast %cst_28 : f32 to vector<1x128xf32>
    %120 = arith.addf %119, %118 : vector<1x128xf32>
    %121 = arith.divf %119, %120 : vector<1x128xf32>
    %122 = vector.extract_strided_slice %121 {offsets = [0, 0], sizes = [1, 32], strides = [1, 1]} : vector<1x128xf32> to vector<1x32xf32>
    %123 = vector.extract_strided_slice %121 {offsets = [0, 32], sizes = [1, 32], strides = [1, 1]} : vector<1x128xf32> to vector<1x32xf32>
    %124 = vector.extract_strided_slice %121 {offsets = [0, 64], sizes = [1, 32], strides = [1, 1]} : vector<1x128xf32> to vector<1x32xf32>
    %cst_29 = arith.constant 2.000000e+00 : f32
    %125 = vector.broadcast %cst_29 : f32 to vector<1x32xf32>
    %126 = arith.mulf %125, %124 : vector<1x32xf32>
    %cst_30 = arith.constant 1.000000e+00 : f32
    %127 = vector.broadcast %cst_30 : f32 to vector<1x32xf32>
    %128 = arith.subf %126, %127 : vector<1x32xf32>
    %129 = vector.extract_strided_slice %121 {offsets = [0, 96], sizes = [1, 32], strides = [1, 1]} : vector<1x128xf32> to vector<1x32xf32>
    %130 = arith.mulf %123, %111 : vector<1x32xf32>
    %131 = arith.mulf %122, %128 : vector<1x32xf32>
    %132 = arith.addf %130, %131 : vector<1x32xf32>
    %133 = math.tanh %132 : vector<1x32xf32>
    %134 = arith.mulf %129, %133 : vector<1x32xf32>
    %135 = vector.extract_strided_slice %6 {offsets = [6, 0], sizes = [1, 128], strides = [1, 1]} : vector<8x128xf32> to vector<1x128xf32>
    %cst_31 = arith.constant dense<0.000000e+00> : vector<1x128xf32>
    %136 = tpu.matmul %134, %1, %cst_31 {dimension_numbers = #tpu.dot_dimension_numbers<[1], [0], [0], [1], [0, 0, 1, 1], [], []>} : vector<1x32xf32>, vector<32x128xf32>, vector<1x128xf32> -> vector<1x128xf32>
    %137 = arith.addf %135, %136 : vector<1x128xf32>
    %138 = arith.negf %137 : vector<1x128xf32>
    %139 = math.exp %138 : vector<1x128xf32>
    %cst_32 = arith.constant 1.000000e+00 : f32
    %140 = vector.broadcast %cst_32 : f32 to vector<1x128xf32>
    %141 = arith.addf %140, %139 : vector<1x128xf32>
    %142 = arith.divf %140, %141 : vector<1x128xf32>
    %143 = vector.extract_strided_slice %142 {offsets = [0, 0], sizes = [1, 32], strides = [1, 1]} : vector<1x128xf32> to vector<1x32xf32>
    %144 = vector.extract_strided_slice %142 {offsets = [0, 32], sizes = [1, 32], strides = [1, 1]} : vector<1x128xf32> to vector<1x32xf32>
    %145 = vector.extract_strided_slice %142 {offsets = [0, 64], sizes = [1, 32], strides = [1, 1]} : vector<1x128xf32> to vector<1x32xf32>
    %cst_33 = arith.constant 2.000000e+00 : f32
    %146 = vector.broadcast %cst_33 : f32 to vector<1x32xf32>
    %147 = arith.mulf %146, %145 : vector<1x32xf32>
    %cst_34 = arith.constant 1.000000e+00 : f32
    %148 = vector.broadcast %cst_34 : f32 to vector<1x32xf32>
    %149 = arith.subf %147, %148 : vector<1x32xf32>
    %150 = vector.extract_strided_slice %142 {offsets = [0, 96], sizes = [1, 32], strides = [1, 1]} : vector<1x128xf32> to vector<1x32xf32>
    %151 = arith.mulf %144, %132 : vector<1x32xf32>
    %152 = arith.mulf %143, %149 : vector<1x32xf32>
    %153 = arith.addf %151, %152 : vector<1x32xf32>
    %154 = math.tanh %153 : vector<1x32xf32>
    %155 = arith.mulf %150, %154 : vector<1x32xf32>
    %156 = vector.extract_strided_slice %6 {offsets = [7, 0], sizes = [1, 128], strides = [1, 1]} : vector<8x128xf32> to vector<1x128xf32>
    %cst_35 = arith.constant dense<0.000000e+00> : vector<1x128xf32>
    %157 = tpu.matmul %155, %1, %cst_35 {dimension_numbers = #tpu.dot_dimension_numbers<[1], [0], [0], [1], [0, 0, 1, 1], [], []>} : vector<1x32xf32>, vector<32x128xf32>, vector<1x128xf32> -> vector<1x128xf32>
    %158 = arith.addf %156, %157 : vector<1x128xf32>
    %159 = arith.negf %158 : vector<1x128xf32>
    %160 = math.exp %159 : vector<1x128xf32>
    %cst_36 = arith.constant 1.000000e+00 : f32
    %161 = vector.broadcast %cst_36 : f32 to vector<1x128xf32>
    %162 = arith.addf %161, %160 : vector<1x128xf32>
    %163 = arith.divf %161, %162 : vector<1x128xf32>
    %164 = vector.extract_strided_slice %163 {offsets = [0, 0], sizes = [1, 32], strides = [1, 1]} : vector<1x128xf32> to vector<1x32xf32>
    %165 = vector.extract_strided_slice %163 {offsets = [0, 32], sizes = [1, 32], strides = [1, 1]} : vector<1x128xf32> to vector<1x32xf32>
    %166 = vector.extract_strided_slice %163 {offsets = [0, 64], sizes = [1, 32], strides = [1, 1]} : vector<1x128xf32> to vector<1x32xf32>
    %cst_37 = arith.constant 2.000000e+00 : f32
    %167 = vector.broadcast %cst_37 : f32 to vector<1x32xf32>
    %168 = arith.mulf %167, %166 : vector<1x32xf32>
    %cst_38 = arith.constant 1.000000e+00 : f32
    %169 = vector.broadcast %cst_38 : f32 to vector<1x32xf32>
    %170 = arith.subf %168, %169 : vector<1x32xf32>
    %171 = vector.extract_strided_slice %163 {offsets = [0, 96], sizes = [1, 32], strides = [1, 1]} : vector<1x128xf32> to vector<1x32xf32>
    %172 = arith.mulf %165, %153 : vector<1x32xf32>
    %173 = arith.mulf %164, %170 : vector<1x32xf32>
    %174 = arith.addf %172, %173 : vector<1x32xf32>
    %175 = math.tanh %174 : vector<1x32xf32>
    %176 = arith.mulf %171, %175 : vector<1x32xf32>
    %177 = tpu.concatenate %29, %50, %71, %92, %113, %134, %155, %176 in 0 : vector<1x32xf32>, vector<1x32xf32>, vector<1x32xf32>, vector<1x32xf32>, vector<1x32xf32>, vector<1x32xf32>, vector<1x32xf32>, vector<1x32xf32> -> vector<8x32xf32>
    %c0_39 = arith.constant 0 : index
    %c0_40 = arith.constant 0 : index
    %178 = vector.load %arg2[%c0_39, %c0_40] : memref<33x4xf32, #tpu.memory_space<vmem>>, vector<32x4xf32>
    %c32 = arith.constant 32 : index
    %c0_41 = arith.constant 0 : index
    %179 = vector.load %arg2[%c32, %c0_41] : memref<33x4xf32, #tpu.memory_space<vmem>>, vector<1x4xf32>
    %cst_42 = arith.constant dense<0.000000e+00> : vector<8x4xf32>
    %180 = tpu.matmul %177, %178, %cst_42 {dimension_numbers = #tpu.dot_dimension_numbers<[1], [0], [0], [1], [0, 0, 1, 1], [], []>} : vector<8x32xf32>, vector<32x4xf32>, vector<8x4xf32> -> vector<8x4xf32>
    %181 = vector.broadcast %179 : vector<1x4xf32> to vector<8x4xf32>
    %182 = arith.addf %180, %181 : vector<8x4xf32>
    %c0_43 = arith.constant 0 : index
    %c0_44 = arith.constant 0 : index
    %183 = vector.load %arg3[%c0_43, %c0_44] : memref<8x4xf32, #tpu.memory_space<vmem>>, vector<8x4xf32>
    tpu.vector_store %arg3[%c0_43, %c0_44], %182 {strides = array<i32>} : memref<8x4xf32, #tpu.memory_space<vmem>>, vector<8x4xf32>,
    return
  }
}

</mosaic_0001>

<llo_original>
// kernel: lstm_net_forward.1
$region0: #{lstm_net_forward.1}
  #allocation0 [shape = 'u32[]', space=smem, size = 0x4, offset = 0x4, fixed_abs, tag = 'smem constant byte address 0x4 - core index']
  #allocation1 [shape = 'u32[144,128]{1,0:T(1,128)}', space=vmem, size = 0x12000, scoped, tag = 'internal scratch']
  %s0 = inlined_call_operand.vmem [shape: f32[8,4], index: 0, kind: input, shape index: {}]
  %s1 = inlined_call_operand.vmem [shape: f32[37,128], index: 1, kind: input, shape index: {}]
  %s2 = inlined_call_operand.vmem [shape: f32[33,4], index: 2, kind: input, shape index: {}]
  %s3 = inlined_call_operand.vmem [shape: f32[8,4], index: 3, kind: output, shape index: {}]
  %s4 = sld [smem:[#allocation0]]
  $region22: #{lstm_net_forward.1} parent=0
    _
  %s6 = ssub.s32 1, %s4
  %s7 = scalar_select 0, %s6, %s4
  // Predicated region
  $region2: #{lstm_net_forward.1} parent=0 // pred_check
    _
  $region3: #{lstm_net_forward.1} parent=0 // pred_check_branch
    %9 = sbr.rel (0) target = $region5
  $region4: #{lstm_net_forward.1} parent=0 // pred_region
    _
  $region5: #{lstm_net_forward.1} parent=0 // pred_fallthru
    _
  // Predicated region
  $region6: #{lstm_net_forward.1} parent=0 // pred_check
    _
  $region7: #{lstm_net_forward.1} parent=0 // pred_check_branch
    %11 = sbr.rel (0) target = $region9
  $region8: #{lstm_net_forward.1} parent=0 // pred_region
    _
  $region9: #{lstm_net_forward.1} parent=0 // pred_fallthru
    _
  // Predicated region
  $region10: #{lstm_net_forward.1} parent=0 // pred_check
    _
  $region11: #{lstm_net_forward.1} parent=0 // pred_check_branch
    %13 = sbr.rel (0) target = $region13
  $region12: #{lstm_net_forward.1} parent=0 // pred_region
    _
  $region13: #{lstm_net_forward.1} parent=0 // pred_fallthru
    _
  %v14 = vld [vmem:[%s1] sm:$0xf]
  %v15 = vld [vmem:[%s1 + $0x4] sm:$0xff]
  %v16 = vld [vmem:[%s1 + $0xc] sm:$0xff]
  %v17 = vld [vmem:[%s1 + $0x14] sm:$0xff]
  %v18 = vld [vmem:[%s1 + $0x1c] sm:$0xff]
  %v19 = vld [vmem:[%s1 + $0x24] sm:$0x1]
  %v20 = vld [vmem:[%s0] sm:$0xff]
  %v21 = vlaneseq
  %v22 = vshrl.u32 %v21, 7
  %v23 = vsub.s32 0, %v22
  %v24 = vrot.slane %v19, %v23
  %vm25 = vcmask 31744
  %v27 = vsel %vm25, %v20, 0
  %vm29 = vcmask 1043456
  %v31 = vsel %vm29, %v14, 0
  %33 = vmatprep.subr.mxu0 0.0
  %34 = vmatpush1.msra.mxu0 %v31
  %35 = vmatprep.subr.mxu0 0.0
  %36 = vmatpush1.msra.mxu0 0.0
  %37 = vmatprep.subr.mxu0 0.0
  %38 = vmatpush1.msra.mxu0 0.0
  %39 = vmatprep.subr.mxu0 0.0
  %40 = vmatpush1.msra.mxu0 0.0
  %41 = vmatprep.subr.mxu0 0.0
  %42 = vmatpush1.msra.mxu0 0.0
  %43 = vmatprep.subr.mxu0 0.0
  %44 = vmatpush1.msra.mxu0 0.0
  %45 = vmatprep.subr.mxu0 0.0
  %46 = vmatpush1.msra.mxu0 0.0
  %47 = vmatprep.subr.mxu0 0.0
  %48 = vmatpush1.msra.mxu0 0.0
  %49 = vmatprep.subr.mxu0 0.0
  %50 = vmatpush1.msra.mxu0 0.0
  %51 = vmatprep.subr.mxu0 0.0
  %52 = vmatpush1.msra.mxu0 0.0
  %53 = vmatprep.subr.mxu0 0.0
  %54 = vmatpush1.msra.mxu0 0.0
  %55 = vmatprep.subr.mxu0 0.0
  %56 = vmatpush1.msra.mxu0 0.0
  %57 = vmatprep.subr.mxu0 0.0
  %58 = vmatpush1.msra.mxu0 0.0
  %59 = vmatprep.subr.mxu0 0.0
  %60 = vmatpush1.msra.mxu0 0.0
  %61 = vmatprep.subr.mxu0 0.0
  %62 = vmatpush1.msra.mxu0 0.0
  %63 = vmatprep.subr.mxu0 0.0
  %64 = vmatpush1.msra.mxu0 0.0
  %65 = vmatprep.subr.mxu0 0.0
  %66 = vmatpush1.msra.mxu0 0.0
  %67 = vmatprep.subr.mxu0 0.0
  %68 = vmatpush1.msra.mxu0 0.0
  %69 = vmatprep.subr.mxu0 0.0
  %70 = vmatpush1.msra.mxu0 0.0
  %71 = vmatprep.subr.mxu0 0.0
  %72 = vmatpush1.msra.mxu0 0.0
  %73 = vmatprep.subr.mxu0 0.0
  %74 = vmatpush1.msra.mxu0 0.0
  %75 = vmatprep.subr.mxu0 0.0
  %76 = vmatpush1.msra.mxu0 0.0
  %77 = vmatprep.subr.mxu0 0.0
  %78 = vmatpush1.msra.mxu0 0.0
  %79 = vmatprep.subr.mxu0 0.0
  %80 = vmatpush1.msra.mxu0 0.0
  %81 = vmatprep.subr.mxu0 0.0
  %82 = vmatpush1.msra.mxu0 0.0
  %83 = vmatprep.subr.mxu0 0.0
  %84 = vmatpush1.msra.mxu0 0.0
  %85 = vmatprep.subr.mxu0 0.0
  %86 = vmatpush1.msra.mxu0 0.0
  %87 = vmatprep.subr.mxu0 0.0
  %88 = vmatpush1.msra.mxu0 0.0
  %89 = vmatprep.subr.mxu0 0.0
  %90 = vmatpush1.msra.mxu0 0.0
  %91 = vmatprep.subr.mxu0 0.0
  %92 = vmatpush1.msra.mxu0 0.0
  %93 = vmatprep.subr.mxu0 0.0
  %94 = vmatpush1.msra.mxu0 0.0
  %95 = vmatprep.subr.mxu0 0.0
  %96 = vmatpush1.msra.mxu0 0.0
  %97 = vmatprep.mubr.f32.mxu0 0.0
  %98 = vmatmul.mubr.f32.gmra.mrb[0].mxu0 %v27
  %v99 = vpop.f32.mrb[0].mxu0
  %v100 = vadd.f32 %v24, %v99
  %v101 = vpop.f32.mrb[0].mxu0
  %102 = vdwg.mxu0
  %vm103 = vcmask 261120
  %v105 = vsel %vm103, 0.0, 0
  %107 = vmatprep.subr.mxu0 0.0
  %108 = vmatpush1.msra.mxu0 %v15
  %109 = vmatprep.subr.mxu0 0.0
  %110 = vmatpush1.msra.mxu0 %v16
  %111 = vmatprep.subr.mxu0 0.0
  %112 = vmatpush1.msra.mxu0 %v17
  %113 = vmatprep.subr.mxu0 0.0
  %114 = vmatpush1.msra.mxu0 %v18
  %115 = vmatprep.subr.mxu0 0.0
  %116 = vmatpush1.msra.mxu0 0.0
  %117 = vmatprep.subr.mxu0 0.0
  %118 = vmatpush1.msra.mxu0 0.0
  %119 = vmatprep.subr.mxu0 0.0
  %120 = vmatpush1.msra.mxu0 0.0
  %121 = vmatprep.subr.mxu0 0.0
  %122 = vmatpush1.msra.mxu0 0.0
  %123 = vmatprep.subr.mxu0 0.0
  %124 = vmatpush1.msra.mxu0 0.0
  %125 = vmatprep.subr.mxu0 0.0
  %126 = vmatpush1.msra.mxu0 0.0
  %127 = vmatprep.subr.mxu0 0.0
  %128 = vmatpush1.msra.mxu0 0.0
  %129 = vmatprep.subr.mxu0 0.0
  %130 = vmatpush1.msra.mxu0 0.0
  %131 = vmatprep.subr.mxu0 0.0
  %132 = vmatpush1.msra.mxu0 0.0
  %133 = vmatprep.subr.mxu0 0.0
  %134 = vmatpush1.msra.mxu0 0.0
  %135 = vmatprep.subr.mxu0 0.0
  %136 = vmatpush1.msra.mxu0 0.0
  %137 = vmatprep.subr.mxu0 0.0
  %138 = vmatpush1.msra.mxu0 0.0
  %139 = vmatprep.subr.mxu0 0.0
  %140 = vmatpush1.msra.mxu0 0.0
  %141 = vmatprep.subr.mxu0 0.0
  %142 = vmatpush1.msra.mxu0 0.0
  %143 = vmatprep.subr.mxu0 0.0
  %144 = vmatpush1.msra.mxu0 0.0
  %145 = vmatprep.subr.mxu0 0.0
  %146 = vmatpush1.msra.mxu0 0.0
  %147 = vmatprep.subr.mxu0 0.0
  %148 = vmatpush1.msra.mxu0 0.0
  %149 = vmatprep.subr.mxu0 0.0
  %150 = vmatpush1.msra.mxu0 0.0
  %151 = vmatprep.subr.mxu0 0.0
  %152 = vmatpush1.msra.mxu0 0.0
  %153 = vmatprep.subr.mxu0 0.0
  %154 = vmatpush1.msra.mxu0 0.0
  %155 = vmatprep.subr.mxu0 0.0
  %156 = vmatpush1.msra.mxu0 0.0
  %157 = vmatprep.subr.mxu0 0.0
  %158 = vmatpush1.msra.mxu0 0.0
  %159 = vmatprep.subr.mxu0 0.0
  %160 = vmatpush1.msra.mxu0 0.0
  %161 = vmatprep.subr.mxu0 0.0
  %162 = vmatpush1.msra.mxu0 0.0
  %163 = vmatprep.subr.mxu0 0.0
  %164 = vmatpush1.msra.mxu0 0.0
  %165 = vmatprep.subr.mxu0 0.0
  %166 = vmatpush1.msra.mxu0 0.0
  %167 = vmatprep.subr.mxu0 0.0
  %168 = vmatpush1.msra.mxu0 0.0
  %169 = vmatprep.subr.mxu0 0.0
  %170 = vmatpush1.msra.mxu0 0.0
  %171 = vmatprep.mubr.f32.mxu0 0.0
  %172 = vmatmul.mubr.f32.gmra.mrb[0].mxu0 %v105
  %v173 = vpop.f32.mrb[0].mxu0
  %v174 = vadd.f32 0.0, %v173
  %v175 = vpop.f32.mrb[0].mxu0
  %176 = vdwg.mxu0
  %v177 = vadd.f32 %v100, %v174
  %v178 = vxor.u32 %v177, 2147483648
  %v179 = vmul.f32 %v178, 1.442695
  %v180 = vpow.pop %v179
  %v181 = vadd.f32 %v180, 1.0
  %v182 = vrcp.pop %v181
  %v183 = vmul.f32 1.0, %v182
  %v184 = vmul.f32 %v183, 2.0
  %v185 = vsub.f32 %v184, 1.0
  %v186 = vmul.f32 %v183, 0.0
  %188 = vrot.lane.b32.xlu0 %v185, 64
  %v189 = vpop.permute.xlu0 %188
  %v191 = vmul.f32 %v183, %v189
  %193 = vrot.lane.b32.xlu0 %v191, 32
  %v194 = vpop.permute.xlu0 %193
  %v196 = vadd.f32 %v186, %v194
  %v197 = vtanh.pop %v196
  %199 = vrot.lane.b32.xlu0 %v197, 64
  %v200 = vpop.permute.xlu0 %199
  %v202 = vmul.f32 %v183, %v200
  %204 = vrot.lane.b32.xlu0 %v202, 32
  %v205 = vpop.permute.xlu0 %204
  %v206 = vsel %vm103, %v205, 0
  %208 = vmatprep.subr.mxu0 0.0
  %209 = vmatpush1.msra.mxu0 %v15
  %210 = vmatprep.subr.mxu0 0.0
  %211 = vmatpush1.msra.mxu0 %v16
  %212 = vmatprep.subr.mxu0 0.0
  %213 = vmatpush1.msra.mxu0 %v17
  %214 = vmatprep.subr.mxu0 0.0
  %215 = vmatpush1.msra.mxu0 %v18
  %216 = vmatprep.subr.mxu0 0.0
  %217 = vmatpush1.msra.mxu0 0.0
  %218 = vmatprep.subr.mxu0 0.0
  %219 = vmatpush1.msra.mxu0 0.0
  %220 = vmatprep.subr.mxu0 0.0
  %221 = vmatpush1.msra.mxu0 0.0
  %222 = vmatprep.subr.mxu0 0.0
  %223 = vmatpush1.msra.mxu0 0.0
  %224 = vmatprep.subr.mxu0 0.0
  %225 = vmatpush1.msra.mxu0 0.0
  %226 = vmatprep.subr.mxu0 0.0
  %227 = vmatpush1.msra.mxu0 0.0
  %228 = vmatprep.subr.mxu0 0.0
  %229 = vmatpush1.msra.mxu0 0.0
  %230 = vmatprep.subr.mxu0 0.0
  %231 = vmatpush1.msra.mxu0 0.0
  %232 = vmatprep.subr.mxu0 0.0
  %233 = vmatpush1.msra.mxu0 0.0
  %234 = vmatprep.subr.mxu0 0.0
  %235 = vmatpush1.msra.mxu0 0.0
  %236 = vmatprep.subr.mxu0 0.0
  %237 = vmatpush1.msra.mxu0 0.0
  %238 = vmatprep.subr.mxu0 0.0
  %239 = vmatpush1.msra.mxu0 0.0
  %240 = vmatprep.subr.mxu0 0.0
  %241 = vmatpush1.msra.mxu0 0.0
  %242 = vmatprep.subr.mxu0 0.0
  %243 = vmatpush1.msra.mxu0 0.0
  %244 = vmatprep.subr.mxu0 0.0
  %245 = vmatpush1.msra.mxu0 0.0
  %246 = vmatprep.subr.mxu0 0.0
  %247 = vmatpush1.msra.mxu0 0.0
  %248 = vmatprep.subr.mxu0 0.0
  %249 = vmatpush1.msra.mxu0 0.0
  %250 = vmatprep.subr.mxu0 0.0
  %251 = vmatpush1.msra.mxu0 0.0
  %252 = vmatprep.subr.mxu0 0.0
  %253 = vmatpush1.msra.mxu0 0.0
  %254 = vmatprep.subr.mxu0 0.0
  %255 = vmatpush1.msra.mxu0 0.0
  %256 = vmatprep.subr.mxu0 0.0
  %257 = vmatpush1.msra.mxu0 0.0
  %258 = vmatprep.subr.mxu0 0.0
  %259 = vmatpush1.msra.mxu0 0.0
  %260 = vmatprep.subr.mxu0 0.0
  %261 = vmatpush1.msra.mxu0 0.0
  %262 = vmatprep.subr.mxu0 0.0
  %263 = vmatpush1.msra.mxu0 0.0
  %264 = vmatprep.subr.mxu0 0.0
  %265 = vmatpush1.msra.mxu0 0.0
  %266 = vmatprep.subr.mxu0 0.0
  %267 = vmatpush1.msra.mxu0 0.0
  %268 = vmatprep.subr.mxu0 0.0
  %269 = vmatpush1.msra.mxu0 0.0
  %270 = vmatprep.subr.mxu0 0.0
  %271 = vmatpush1.msra.mxu0 0.0
  %272 = vmatprep.mubr.f32.mxu0 0.0
  %273 = vmatmul.mubr.f32.gmra.mrb[0].mxu0 %v206
  %v274 = vpop.f32.mrb[0].mxu0
  %v275 = vadd.f32 0.0, %v274
  %v276 = vpop.f32.mrb[0].mxu0
  %277 = vdwg.mxu0
  %v279 = vrot.slane %v275, 7
  %v281 = vadd.f32 %v100, %v279
  %v282 = vxor.u32 %v281, 2147483648
  %v283 = vmul.f32 %v282, 1.442695
  %v284 = vpow.pop %v283
  %v285 = vadd.f32 %v284, 1.0
  %v286 = vrcp.pop %v285
  %v287 = vmul.f32 1.0, %v286
  %v288 = vmul.f32 %v287, 2.0
  %v289 = vsub.f32 %v288, 1.0
  %v291 = vrot.slane %v196, 7
  %v293 = vmul.f32 %v287, %v291
  %295 = vrot.lane.b32.xlu0 %v289, 64
  %v296 = vpop.permute.xlu0 %295
  %v298 = vmul.f32 %v287, %v296
  %300 = vrot.lane.b32.xlu0 %v298, 32
  %v301 = vpop.permute.xlu0 %300
  %v303 = vadd.f32 %v293, %v301
  %v304 = vtanh.pop %v303
  %306 = vrot.lane.b32.xlu0 %v304, 64
  %v307 = vpop.permute.xlu0 %306
  %v309 = vmul.f32 %v287, %v307
  %v311 = vrot.slane %v309, 1
  %312 = vrot.lane.b32.xlu0 %v311, 32
  %v313 = vpop.permute.xlu0 %312
  %v314 = vsel %vm103, %v313, 0
  %316 = vmatprep.subr.mxu0 0.0
  %317 = vmatpush1.msra.mxu0 %v15
  %318 = vmatprep.subr.mxu0 0.0
  %319 = vmatpush1.msra.mxu0 %v16
  %320 = vmatprep.subr.mxu0 0.0
  %321 = vmatpush1.msra.mxu0 %v17
  %322 = vmatprep.subr.mxu0 0.0
  %323 = vmatpush1.msra.mxu0 %v18
  %324 = vmatprep.subr.mxu0 0.0
  %325 = vmatpush1.msra.mxu0 0.0
  %326 = vmatprep.subr.mxu0 0.0
  %327 = vmatpush1.msra.mxu0 0.0
  %328 = vmatprep.subr.mxu0 0.0
  %329 = vmatpush1.msra.mxu0 0.0
  %330 = vmatprep.subr.mxu0 0.0
  %331 = vmatpush1.msra.mxu0 0.0
  %332 = vmatprep.subr.mxu0 0.0
  %333 = vmatpush1.msra.mxu0 0.0
  %334 = vmatprep.subr.mxu0 0.0
  %335 = vmatpush1.msra.mxu0 0.0
  %336 = vmatprep.subr.mxu0 0.0
  %337 = vmatpush1.msra.mxu0 0.0
  %338 = vmatprep.subr.mxu0 0.0
  %339 = vmatpush1.msra.mxu0 0.0
  %340 = vmatprep.subr.mxu0 0.0
  %341 = vmatpush1.msra.mxu0 0.0
  %342 = vmatprep.subr.mxu0 0.0
  %343 = vmatpush1.msra.mxu0 0.0
  %344 = vmatprep.subr.mxu0 0.0
  %345 = vmatpush1.msra.mxu0 0.0
  %346 = vmatprep.subr.mxu0 0.0
  %347 = vmatpush1.msra.mxu0 0.0
  %348 = vmatprep.subr.mxu0 0.0
  %349 = vmatpush1.msra.mxu0 0.0
  %350 = vmatprep.subr.mxu0 0.0
  %351 = vmatpush1.msra.mxu0 0.0
  %352 = vmatprep.subr.mxu0 0.0
  %353 = vmatpush1.msra.mxu0 0.0
  %354 = vmatprep.subr.mxu0 0.0
  %355 = vmatpush1.msra.mxu0 0.0
  %356 = vmatprep.subr.mxu0 0.0
  %357 = vmatpush1.msra.mxu0 0.0
  %358 = vmatprep.subr.mxu0 0.0
  %359 = vmatpush1.msra.mxu0 0.0
  %360 = vmatprep.subr.mxu0 0.0
  %361 = vmatpush1.msra.mxu0 0.0
  %362 = vmatprep.subr.mxu0 0.0
  %363 = vmatpush1.msra.mxu0 0.0
  %364 = vmatprep.subr.mxu0 0.0
  %365 = vmatpush1.msra.mxu0 0.0
  %366 = vmatprep.subr.mxu0 0.0
  %367 = vmatpush1.msra.mxu0 0.0
  %368 = vmatprep.subr.mxu0 0.0
  %369 = vmatpush1.msra.mxu0 0.0
  %370 = vmatprep.subr.mxu0 0.0
  %371 = vmatpush1.msra.mxu0 0.0
  %372 = vmatprep.subr.mxu0 0.0
  %373 = vmatpush1.msra.mxu0 0.0
  %374 = vmatprep.subr.mxu0 0.0
  %375 = vmatpush1.msra.mxu0 0.0
  %376 = vmatprep.subr.mxu0 0.0
  %377 = vmatpush1.msra.mxu0 0.0
  %378 = vmatprep.subr.mxu0 0.0
  %379 = vmatpush1.msra.mxu0 0.0
  %380 = vmatprep.mubr.f32.mxu0 0.0
  %381 = vmatmul.mubr.f32.gmra.mrb[0].mxu0 %v314
  %v382 = vpop.f32.mrb[0].mxu0
  %v383 = vadd.f32 0.0, %v382
  %v384 = vpop.f32.mrb[0].mxu0
  %385 = vdwg.mxu0
  %v387 = vrot.slane %v383, 6
  %v389 = vadd.f32 %v100, %v387
  %v390 = vxor.u32 %v389, 2147483648
  %v391 = vmul.f32 %v390, 1.442695
  %v392 = vpow.pop %v391
  %v393 = vadd.f32 %v392, 1.0
  %v394 = vrcp.pop %v393
  %v395 = vmul.f32 1.0, %v394
  %v396 = vmul.f32 %v395, 2.0
  %v397 = vsub.f32 %v396, 1.0
  %v399 = vrot.slane %v303, 7
  %v401 = vmul.f32 %v395, %v399
  %403 = vrot.lane.b32.xlu0 %v397, 64
  %v404 = vpop.permute.xlu0 %403
  %v406 = vmul.f32 %v395, %v404
  %408 = vrot.lane.b32.xlu0 %v406, 32
  %v409 = vpop.permute.xlu0 %408
  %v411 = vadd.f32 %v401, %v409
  %v412 = vtanh.pop %v411
  %414 = vrot.lane.b32.xlu0 %v412, 64
  %v415 = vpop.permute.xlu0 %414
  %v417 = vmul.f32 %v395, %v415
  %v419 = vrot.slane %v417, 2
  %420 = vrot.lane.b32.xlu0 %v419, 32
  %v421 = vpop.permute.xlu0 %420
  %v422 = vsel %vm103, %v421, 0
  %424 = vmatprep.subr.mxu0 0.0
  %425 = vmatpush1.msra.mxu0 %v15
  %426 = vmatprep.subr.mxu0 0.0
  %427 = vmatpush1.msra.mxu0 %v16
  %428 = vmatprep.subr.mxu0 0.0
  %429 = vmatpush1.msra.mxu0 %v17
  %430 = vmatprep.subr.mxu0 0.0
  %431 = vmatpush1.msra.mxu0 %v18
  %432 = vmatprep.subr.mxu0 0.0
  %433 = vmatpush1.msra.mxu0 0.0
  %434 = vmatprep.subr.mxu0 0.0
  %435 = vmatpush1.msra.mxu0 0.0
  %436 = vmatprep.subr.mxu0 0.0
  %437 = vmatpush1.msra.mxu0 0.0
  %438 = vmatprep.subr.mxu0 0.0
  %439 = vmatpush1.msra.mxu0 0.0
  %440 = vmatprep.subr.mxu0 0.0
  %441 = vmatpush1.msra.mxu0 0.0
  %442 = vmatprep.subr.mxu0 0.0
  %443 = vmatpush1.msra.mxu0 0.0
  %444 = vmatprep.subr.mxu0 0.0
  %445 = vmatpush1.msra.mxu0 0.0
  %446 = vmatprep.subr.mxu0 0.0
  %447 = vmatpush1.msra.mxu0 0.0
  %448 = vmatprep.subr.mxu0 0.0
  %449 = vmatpush1.msra.mxu0 0.0
  %450 = vmatprep.subr.mxu0 0.0
  %451 = vmatpush1.msra.mxu0 0.0
  %452 = vmatprep.subr.mxu0 0.0
  %453 = vmatpush1.msra.mxu0 0.0
  %454 = vmatprep.subr.mxu0 0.0
  %455 = vmatpush1.msra.mxu0 0.0
  %456 = vmatprep.subr.mxu0 0.0
  %457 = vmatpush1.msra.mxu0 0.0
  %458 = vmatprep.subr.mxu0 0.0
  %459 = vmatpush1.msra.mxu0 0.0
  %460 = vmatprep.subr.mxu0 0.0
  %461 = vmatpush1.msra.mxu0 0.0
  %462 = vmatprep.subr.mxu0 0.0
  %463 = vmatpush1.msra.mxu0 0.0
  %464 = vmatprep.subr.mxu0 0.0
  %465 = vmatpush1.msra.mxu0 0.0
  %466 = vmatprep.subr.mxu0 0.0
  %467 = vmatpush1.msra.mxu0 0.0
  %468 = vmatprep.subr.mxu0 0.0
  %469 = vmatpush1.msra.mxu0 0.0
  %470 = vmatprep.subr.mxu0 0.0
  %471 = vmatpush1.msra.mxu0 0.0
  %472 = vmatprep.subr.mxu0 0.0
  %473 = vmatpush1.msra.mxu0 0.0
  %474 = vmatprep.subr.mxu0 0.0
  %475 = vmatpush1.msra.mxu0 0.0
  %476 = vmatprep.subr.mxu0 0.0
  %477 = vmatpush1.msra.mxu0 0.0
  %478 = vmatprep.subr.mxu0 0.0
  %479 = vmatpush1.msra.mxu0 0.0
  %480 = vmatprep.subr.mxu0 0.0
  %481 = vmatpush1.msra.mxu0 0.0
  %482 = vmatprep.subr.mxu0 0.0
  %483 = vmatpush1.msra.mxu0 0.0
  %484 = vmatprep.subr.mxu0 0.0
  %485 = vmatpush1.msra.mxu0 0.0
  %486 = vmatprep.subr.mxu0 0.0
  %487 = vmatpush1.msra.mxu0 0.0
  %488 = vmatprep.mubr.f32.mxu0 0.0
  %489 = vmatmul.mubr.f32.gmra.mrb[0].mxu0 %v422
  %v490 = vpop.f32.mrb[0].mxu0
  %v491 = vadd.f32 0.0, %v490
  %v492 = vpop.f32.mrb[0].mxu0
  %493 = vdwg.mxu0
  %v495 = vrot.slane %v491, 5
  %v497 = vadd.f32 %v100, %v495
  %v498 = vxor.u32 %v497, 2147483648
  %v499 = vmul.f32 %v498, 1.442695
  %v500 = vpow.pop %v499
  %v501 = vadd.f32 %v500, 1.0
  %v502 = vrcp.pop %v501
  %v503 = vmul.f32 1.0, %v502
  %v504 = vmul.f32 %v503, 2.0
  %v505 = vsub.f32 %v504, 1.0
  %v507 = vrot.slane %v411, 7
  %v509 = vmul.f32 %v503, %v507
  %511 = vrot.lane.b32.xlu0 %v505, 64
  %v512 = vpop.permute.xlu0 %511
  %v514 = vmul.f32 %v503, %v512
  %516 = vrot.lane.b32.xlu0 %v514, 32
  %v517 = vpop.permute.xlu0 %516
  %v519 = vadd.f32 %v509, %v517
  %v520 = vtanh.pop %v519
  %522 = vrot.lane.b32.xlu0 %v520, 64
  %v523 = vpop.permute.xlu0 %522
  %v525 = vmul.f32 %v503, %v523
  %v527 = vrot.slane %v525, 3
  %528 = vrot.lane.b32.xlu0 %v527, 32
  %v529 = vpop.permute.xlu0 %528
  %v530 = vsel %vm103, %v529, 0
  %532 = vmatprep.subr.mxu0 0.0
  %533 = vmatpush1.msra.mxu0 %v15
  %534 = vmatprep.subr.mxu0 0.0
  %535 = vmatpush1.msra.mxu0 %v16
  %536 = vmatprep.subr.mxu0 0.0
  %537 = vmatpush1.msra.mxu0 %v17
  %538 = vmatprep.subr.mxu0 0.0
  %539 = vmatpush1.msra.mxu0 %v18
  %540 = vmatprep.subr.mxu0 0.0
  %541 = vmatpush1.msra.mxu0 0.0
  %542 = vmatprep.subr.mxu0 0.0
  %543 = vmatpush1.msra.mxu0 0.0
  %544 = vmatprep.subr.mxu0 0.0
  %545 = vmatpush1.msra.mxu0 0.0
  %546 = vmatprep.subr.mxu0 0.0
  %547 = vmatpush1.msra.mxu0 0.0
  %548 = vmatprep.subr.mxu0 0.0
  %549 = vmatpush1.msra.mxu0 0.0
  %550 = vmatprep.subr.mxu0 0.0
  %551 = vmatpush1.msra.mxu0 0.0
  %552 = vmatprep.subr.mxu0 0.0
  %553 = vmatpush1.msra.mxu0 0.0
  %554 = vmatprep.subr.mxu0 0.0
  %555 = vmatpush1.msra.mxu0 0.0
  %556 = vmatprep.subr.mxu0 0.0
  %557 = vmatpush1.msra.mxu0 0.0
  %558 = vmatprep.subr.mxu0 0.0
  %559 = vmatpush1.msra.mxu0 0.0
  %560 = vmatprep.subr.mxu0 0.0
  %561 = vmatpush1.msra.mxu0 0.0
  %562 = vmatprep.subr.mxu0 0.0
  %563 = vmatpush1.msra.mxu0 0.0
  %564 = vmatprep.subr.mxu0 0.0
  %565 = vmatpush1.msra.mxu0 0.0
  %566 = vmatprep.subr.mxu0 0.0
  %567 = vmatpush1.msra.mxu0 0.0
  %568 = vmatprep.subr.mxu0 0.0
  %569 = vmatpush1.msra.mxu0 0.0
  %570 = vmatprep.subr.mxu0 0.0
  %571 = vmatpush1.msra.mxu0 0.0
  %572 = vmatprep.subr.mxu0 0.0
  %573 = vmatpush1.msra.mxu0 0.0
  %574 = vmatprep.subr.mxu0 0.0
  %575 = vmatpush1.msra.mxu0 0.0
  %576 = vmatprep.subr.mxu0 0.0
  %577 = vmatpush1.msra.mxu0 0.0
  %578 = vmatprep.subr.mxu0 0.0
  %579 = vmatpush1.msra.mxu0 0.0
  %580 = vmatprep.subr.mxu0 0.0
  %581 = vmatpush1.msra.mxu0 0.0
  %582 = vmatprep.subr.mxu0 0.0
  %583 = vmatpush1.msra.mxu0 0.0
  %584 = vmatprep.subr.mxu0 0.0
  %585 = vmatpush1.msra.mxu0 0.0
  %586 = vmatprep.subr.mxu0 0.0
  %587 = vmatpush1.msra.mxu0 0.0
  %588 = vmatprep.subr.mxu0 0.0
  %589 = vmatpush1.msra.mxu0 0.0
  %590 = vmatprep.subr.mxu0 0.0
  %591 = vmatpush1.msra.mxu0 0.0
  %592 = vmatprep.subr.mxu0 0.0
  %593 = vmatpush1.msra.mxu0 0.0
  %594 = vmatprep.subr.mxu0 0.0
  %595 = vmatpush1.msra.mxu0 0.0
  %596 = vmatprep.mubr.f32.mxu0 0.0
  %597 = vmatmul.mubr.f32.gmra.mrb[0].mxu0 %v530
  %v598 = vpop.f32.mrb[0].mxu0
  %v599 = vadd.f32 0.0, %v598
  %v600 = vpop.f32.mrb[0].mxu0
  %601 = vdwg.mxu0
  %v603 = vrot.slane %v599, 4
  %v605 = vadd.f32 %v100, %v603
  %v606 = vxor.u32 %v605, 2147483648
  %v607 = vmul.f32 %v606, 1.442695
  %v608 = vpow.pop %v607
  %v609 = vadd.f32 %v608, 1.0
  %v610 = vrcp.pop %v609
  %v611 = vmul.f32 1.0, %v610
  %v612 = vmul.f32 %v611, 2.0
  %v613 = vsub.f32 %v612, 1.0
  %v615 = vrot.slane %v519, 7
  %v617 = vmul.f32 %v611, %v615
  %619 = vrot.lane.b32.xlu0 %v613, 64
  %v620 = vpop.permute.xlu0 %619
  %v622 = vmul.f32 %v611, %v620
  %624 = vrot.lane.b32.xlu0 %v622, 32
  %v625 = vpop.permute.xlu0 %624
  %v627 = vadd.f32 %v617, %v625
  %v628 = vtanh.pop %v627
  %630 = vrot.lane.b32.xlu0 %v628, 64
  %v631 = vpop.permute.xlu0 %630
  %v633 = vmul.f32 %v611, %v631
  %v635 = vrot.slane %v633, 4
  %636 = vrot.lane.b32.xlu0 %v635, 32
  %v637 = vpop.permute.xlu0 %636
  %v638 = vsel %vm103, %v637, 0
  %640 = vmatprep.subr.mxu0 0.0
  %641 = vmatpush1.msra.mxu0 %v15
  %642 = vmatprep.subr.mxu0 0.0
  %643 = vmatpush1.msra.mxu0 %v16
  %644 = vmatprep.subr.mxu0 0.0
  %645 = vmatpush1.msra.mxu0 %v17
  %646 = vmatprep.subr.mxu0 0.0
  %647 = vmatpush1.msra.mxu0 %v18
  %648 = vmatprep.subr.mxu0 0.0
  %649 = vmatpush1.msra.mxu0 0.0
  %650 = vmatprep.subr.mxu0 0.0
  %651 = vmatpush1.msra.mxu0 0.0
  %652 = vmatprep.subr.mxu0 0.0
  %653 = vmatpush1.msra.mxu0 0.0
  %654 = vmatprep.subr.mxu0 0.0
  %655 = vmatpush1.msra.mxu0 0.0
  %656 = vmatprep.subr.mxu0 0.0
  %657 = vmatpush1.msra.mxu0 0.0
  %658 = vmatprep.subr.mxu0 0.0
  %659 = vmatpush1.msra.mxu0 0.0
  %660 = vmatprep.subr.mxu0 0.0
  %661 = vmatpush1.msra.mxu0 0.0
  %662 = vmatprep.subr.mxu0 0.0
  %663 = vmatpush1.msra.mxu0 0.0
  %664 = vmatprep.subr.mxu0 0.0
  %665 = vmatpush1.msra.mxu0 0.0
  %666 = vmatprep.subr.mxu0 0.0
  %667 = vmatpush1.msra.mxu0 0.0
  %668 = vmatprep.subr.mxu0 0.0
  %669 = vmatpush1.msra.mxu0 0.0
  %670 = vmatprep.subr.mxu0 0.0
  %671 = vmatpush1.msra.mxu0 0.0
  %672 = vmatprep.subr.mxu0 0.0
  %673 = vmatpush1.msra.mxu0 0.0
  %674 = vmatprep.subr.mxu0 0.0
  %675 = vmatpush1.msra.mxu0 0.0
  %676 = vmatprep.subr.mxu0 0.0
  %677 = vmatpush1.msra.mxu0 0.0
  %678 = vmatprep.subr.mxu0 0.0
  %679 = vmatpush1.msra.mxu0 0.0
  %680 = vmatprep.subr.mxu0 0.0
  %681 = vmatpush1.msra.mxu0 0.0
  %682 = vmatprep.subr.mxu0 0.0
  %683 = vmatpush1.msra.mxu0 0.0
  %684 = vmatprep.subr.mxu0 0.0
  %685 = vmatpush1.msra.mxu0 0.0
  %686 = vmatprep.subr.mxu0 0.0
  %687 = vmatpush1.msra.mxu0 0.0
  %688 = vmatprep.subr.mxu0 0.0
  %689 = vmatpush1.msra.mxu0 0.0
  %690 = vmatprep.subr.mxu0 0.0
  %691 = vmatpush1.msra.mxu0 0.0
  %692 = vmatprep.subr.mxu0 0.0
  %693 = vmatpush1.msra.mxu0 0.0
  %694 = vmatprep.subr.mxu0 0.0
  %695 = vmatpush1.msra.mxu0 0.0
  %696 = vmatprep.subr.mxu0 0.0
  %697 = vmatpush1.msra.mxu0 0.0
  %698 = vmatprep.subr.mxu0 0.0
  %699 = vmatpush1.msra.mxu0 0.0
  %700 = vmatprep.subr.mxu0 0.0
  %701 = vmatpush1.msra.mxu0 0.0
  %702 = vmatprep.subr.mxu0 0.0
  %703 = vmatpush1.msra.mxu0 0.0
  %704 = vmatprep.mubr.f32.mxu0 0.0
  %705 = vmatmul.mubr.f32.gmra.mrb[0].mxu0 %v638
  %v706 = vpop.f32.mrb[0].mxu0
  %v707 = vadd.f32 0.0, %v706
  %v708 = vpop.f32.mrb[0].mxu0
  %709 = vdwg.mxu0
  %v711 = vrot.slane %v707, 3
  %v713 = vadd.f32 %v100, %v711
  %v714 = vxor.u32 %v713, 2147483648
  %v715 = vmul.f32 %v714, 1.442695
  %v716 = vpow.pop %v715
  %v717 = vadd.f32 %v716, 1.0
  %v718 = vrcp.pop %v717
  %v719 = vmul.f32 1.0, %v718
  %v720 = vmul.f32 %v719, 2.0
  %v721 = vsub.f32 %v720, 1.0
  %v723 = vrot.slane %v627, 7
  %v725 = vmul.f32 %v719, %v723
  %727 = vrot.lane.b32.xlu0 %v721, 64
  %v728 = vpop.permute.xlu0 %727
  %v730 = vmul.f32 %v719, %v728
  %732 = vrot.lane.b32.xlu0 %v730, 32
  %v733 = vpop.permute.xlu0 %732
  %v735 = vadd.f32 %v725, %v733
  %v736 = vtanh.pop %v735
  %738 = vrot.lane.b32.xlu0 %v736, 64
  %v739 = vpop.permute.xlu0 %738
  %v741 = vmul.f32 %v719, %v739
  %v743 = vrot.slane %v741, 5
  %744 = vrot.lane.b32.xlu0 %v743, 32
  %v745 = vpop.permute.xlu0 %744
  %v746 = vsel %vm103, %v745, 0
  %748 = vmatprep.subr.mxu0 0.0
  %749 = vmatpush1.msra.mxu0 %v15
  %750 = vmatprep.subr.mxu0 0.0
  %751 = vmatpush1.msra.mxu0 %v16
  %752 = vmatprep.subr.mxu0 0.0
  %753 = vmatpush1.msra.mxu0 %v17
  %754 = vmatprep.subr.mxu0 0.0
  %755 = vmatpush1.msra.mxu0 %v18
  %756 = vmatprep.subr.mxu0 0.0
  %757 = vmatpush1.msra.mxu0 0.0
  %758 = vmatprep.subr.mxu0 0.0
  %759 = vmatpush1.msra.mxu0 0.0
  %760 = vmatprep.subr.mxu0 0.0
  %761 = vmatpush1.msra.mxu0 0.0
  %762 = vmatprep.subr.mxu0 0.0
  %763 = vmatpush1.msra.mxu0 0.0
  %764 = vmatprep.subr.mxu0 0.0
  %765 = vmatpush1.msra.mxu0 0.0
  %766 = vmatprep.subr.mxu0 0.0
  %767 = vmatpush1.msra.mxu0 0.0
  %768 = vmatprep.subr.mxu0 0.0
  %769 = vmatpush1.msra.mxu0 0.0
  %770 = vmatprep.subr.mxu0 0.0
  %771 = vmatpush1.msra.mxu0 0.0
  %772 = vmatprep.subr.mxu0 0.0
  %773 = vmatpush1.msra.mxu0 0.0
  %774 = vmatprep.subr.mxu0 0.0
  %775 = vmatpush1.msra.mxu0 0.0
  %776 = vmatprep.subr.mxu0 0.0
  %777 = vmatpush1.msra.mxu0 0.0
  %778 = vmatprep.subr.mxu0 0.0
  %779 = vmatpush1.msra.mxu0 0.0
  %780 = vmatprep.subr.mxu0 0.0
  %781 = vmatpush1.msra.mxu0 0.0
  %782 = vmatprep.subr.mxu0 0.0
  %783 = vmatpush1.msra.mxu0 0.0
  %784 = vmatprep.subr.mxu0 0.0
  %785 = vmatpush1.msra.mxu0 0.0
  %786 = vmatprep.subr.mxu0 0.0
  %787 = vmatpush1.msra.mxu0 0.0
  %788 = vmatprep.subr.mxu0 0.0
  %789 = vmatpush1.msra.mxu0 0.0
  %790 = vmatprep.subr.mxu0 0.0
  %791 = vmatpush1.msra.mxu0 0.0
  %792 = vmatprep.subr.mxu0 0.0
  %793 = vmatpush1.msra.mxu0 0.0
  %794 = vmatprep.subr.mxu0 0.0
  %795 = vmatpush1.msra.mxu0 0.0
  %796 = vmatprep.subr.mxu0 0.0
  %797 = vmatpush1.msra.mxu0 0.0
  %798 = vmatprep.subr.mxu0 0.0
  %799 = vmatpush1.msra.mxu0 0.0
  %800 = vmatprep.subr.mxu0 0.0
  %801 = vmatpush1.msra.mxu0 0.0
  %802 = vmatprep.subr.mxu0 0.0
  %803 = vmatpush1.msra.mxu0 0.0
  %804 = vmatprep.subr.mxu0 0.0
  %805 = vmatpush1.msra.mxu0 0.0
  %806 = vmatprep.subr.mxu0 0.0
  %807 = vmatpush1.msra.mxu0 0.0
  %808 = vmatprep.subr.mxu0 0.0
  %809 = vmatpush1.msra.mxu0 0.0
  %810 = vmatprep.subr.mxu0 0.0
  %811 = vmatpush1.msra.mxu0 0.0
  %812 = vmatprep.mubr.f32.mxu0 0.0
  %813 = vmatmul.mubr.f32.gmra.mrb[0].mxu0 %v746
  %v814 = vpop.f32.mrb[0].mxu0
  %v815 = vadd.f32 0.0, %v814
  %v816 = vpop.f32.mrb[0].mxu0
  %817 = vdwg.mxu0
  %v819 = vrot.slane %v815, 2
  %v821 = vadd.f32 %v100, %v819
  %v822 = vxor.u32 %v821, 2147483648
  %v823 = vmul.f32 %v822, 1.442695
  %v824 = vpow.pop %v823
  %v825 = vadd.f32 %v824, 1.0
  %v826 = vrcp.pop %v825
  %v827 = vmul.f32 1.0, %v826
  %v828 = vmul.f32 %v827, 2.0
  %v829 = vsub.f32 %v828, 1.0
  %v831 = vrot.slane %v735, 7
  %v833 = vmul.f32 %v827, %v831
  %835 = vrot.lane.b32.xlu0 %v829, 64
  %v836 = vpop.permute.xlu0 %835
  %v838 = vmul.f32 %v827, %v836
  %840 = vrot.lane.b32.xlu0 %v838, 32
  %v841 = vpop.permute.xlu0 %840
  %v843 = vadd.f32 %v833, %v841
  %v844 = vtanh.pop %v843
  %846 = vrot.lane.b32.xlu0 %v844, 64
  %v847 = vpop.permute.xlu0 %846
  %v849 = vmul.f32 %v827, %v847
  %v851 = vrot.slane %v849, 6
  %852 = vrot.lane.b32.xlu0 %v851, 32
  %v853 = vpop.permute.xlu0 %852
  %v854 = vsel %vm103, %v853, 0
  %856 = vmatprep.subr.mxu0 0.0
  %857 = vmatpush1.msra.mxu0 %v15
  %858 = vmatprep.subr.mxu0 0.0
  %859 = vmatpush1.msra.mxu0 %v16
  %860 = vmatprep.subr.mxu0 0.0
  %861 = vmatpush1.msra.mxu0 %v17
  %862 = vmatprep.subr.mxu0 0.0
  %863 = vmatpush1.msra.mxu0 %v18
  %864 = vmatprep.subr.mxu0 0.0
  %865 = vmatpush1.msra.mxu0 0.0
  %866 = vmatprep.subr.mxu0 0.0
  %867 = vmatpush1.msra.mxu0 0.0
  %868 = vmatprep.subr.mxu0 0.0
  %869 = vmatpush1.msra.mxu0 0.0
  %870 = vmatprep.subr.mxu0 0.0
  %871 = vmatpush1.msra.mxu0 0.0
  %872 = vmatprep.subr.mxu0 0.0
  %873 = vmatpush1.msra.mxu0 0.0
  %874 = vmatprep.subr.mxu0 0.0
  %875 = vmatpush1.msra.mxu0 0.0
  %876 = vmatprep.subr.mxu0 0.0
  %877 = vmatpush1.msra.mxu0 0.0
  %878 = vmatprep.subr.mxu0 0.0
  %879 = vmatpush1.msra.mxu0 0.0
  %880 = vmatprep.subr.mxu0 0.0
  %881 = vmatpush1.msra.mxu0 0.0
  %882 = vmatprep.subr.mxu0 0.0
  %883 = vmatpush1.msra.mxu0 0.0
  %884 = vmatprep.subr.mxu0 0.0
  %885 = vmatpush1.msra.mxu0 0.0
  %886 = vmatprep.subr.mxu0 0.0
  %887 = vmatpush1.msra.mxu0 0.0
  %888 = vmatprep.subr.mxu0 0.0
  %889 = vmatpush1.msra.mxu0 0.0
  %890 = vmatprep.subr.mxu0 0.0
  %891 = vmatpush1.msra.mxu0 0.0
  %892 = vmatprep.subr.mxu0 0.0
  %893 = vmatpush1.msra.mxu0 0.0
  %894 = vmatprep.subr.mxu0 0.0
  %895 = vmatpush1.msra.mxu0 0.0
  %896 = vmatprep.subr.mxu0 0.0
  %897 = vmatpush1.msra.mxu0 0.0
  %898 = vmatprep.subr.mxu0 0.0
  %899 = vmatpush1.msra.mxu0 0.0
  %900 = vmatprep.subr.mxu0 0.0
  %901 = vmatpush1.msra.mxu0 0.0
  %902 = vmatprep.subr.mxu0 0.0
  %903 = vmatpush1.msra.mxu0 0.0
  %904 = vmatprep.subr.mxu0 0.0
  %905 = vmatpush1.msra.mxu0 0.0
  %906 = vmatprep.subr.mxu0 0.0
  %907 = vmatpush1.msra.mxu0 0.0
  %908 = vmatprep.subr.mxu0 0.0
  %909 = vmatpush1.msra.mxu0 0.0
  %910 = vmatprep.subr.mxu0 0.0
  %911 = vmatpush1.msra.mxu0 0.0
  %912 = vmatprep.subr.mxu0 0.0
  %913 = vmatpush1.msra.mxu0 0.0
  %914 = vmatprep.subr.mxu0 0.0
  %915 = vmatpush1.msra.mxu0 0.0
  %916 = vmatprep.subr.mxu0 0.0
  %917 = vmatpush1.msra.mxu0 0.0
  %918 = vmatprep.subr.mxu0 0.0
  %919 = vmatpush1.msra.mxu0 0.0
  %920 = vmatprep.mubr.f32.mxu0 0.0
  %921 = vmatmul.mubr.f32.gmra.mrb[0].mxu0 %v854
  %v922 = vpop.f32.mrb[0].mxu0
  %v923 = vadd.f32 0.0, %v922
  %v924 = vpop.f32.mrb[0].mxu0
  %925 = vdwg.mxu0
  %v927 = vrot.slane %v923, 1
  %v929 = vadd.f32 %v100, %v927
  %v930 = vxor.u32 %v929, 2147483648
  %v931 = vmul.f32 %v930, 1.442695
  %v932 = vpow.pop %v931
  %v933 = vadd.f32 %v932, 1.0
  %v934 = vrcp.pop %v933
  %v935 = vmul.f32 1.0, %v934
  %v936 = vmul.f32 %v935, 2.0
  %v937 = vsub.f32 %v936, 1.0
  %v939 = vrot.slane %v843, 7
  %v941 = vmul.f32 %v935, %v939
  %943 = vrot.lane.b32.xlu0 %v937, 64
  %v944 = vpop.permute.xlu0 %943
  %v946 = vmul.f32 %v935, %v944
  %948 = vrot.lane.b32.xlu0 %v946, 32
  %v949 = vpop.permute.xlu0 %948
  %v951 = vadd.f32 %v941, %v949
  %v952 = vtanh.pop %v951
  %954 = vrot.lane.b32.xlu0 %v952, 64
  %v955 = vpop.permute.xlu0 %954
  %v957 = vmul.f32 %v935, %v955
  %vm958 = vcmask 1040384
  %v959 = vsel %vm958, %v202, %v309
  %vm960 = vcmask 1041408
  %v961 = vsel %vm960, %v959, %v417
  %vm962 = vcmask 1042432
  %v963 = vsel %vm962, %v961, %v525
  %v964 = vsel %vm29, %v963, %v633
  %vm965 = vcmask 1044480
  %v966 = vsel %vm965, %v964, %v741
  %vm967 = vcmask 1045504
  %v968 = vsel %vm967, %v966, %v849
  %vm969 = vcmask 1046528
  %v970 = vsel %vm969, %v968, %v957
  %v971 = vld [vmem:[%s2] sm:$0xff]
  %v972 = vld [vmem:[%s2 + $0x8] sm:$0xff]
  %v973 = vld [vmem:[%s2 + $0x10] sm:$0xff]
  %v974 = vld [vmem:[%s2 + $0x18] sm:$0xff]
  %v975 = vld [vmem:[%s2 + $0x20] sm:$0x1]
  %v976 = vlaneseq
  %v977 = vshrl.u32 %v976, 7
  %v978 = vsub.s32 0, %v977
  %v979 = vrot.slane %v975, %v978
  %981 = vrot.lane.b32.xlu0 %v970, 32
  %v982 = vpop.permute.xlu0 %981
  %v983 = vsel %vm103, %v982, 0
  %985 = vmatprep.subr.mxu0 0.0
  %986 = vmatpush1.msra.mxu0 %v971
  %987 = vmatprep.subr.mxu0 0.0
  %988 = vmatpush1.msra.mxu0 %v972
  %989 = vmatprep.subr.mxu0 0.0
  %990 = vmatpush1.msra.mxu0 %v973
  %991 = vmatprep.subr.mxu0 0.0
  %992 = vmatpush1.msra.mxu0 %v974
  %993 = vmatprep.subr.mxu0 0.0
  %994 = vmatpush1.msra.mxu0 0.0
  %995 = vmatprep.subr.mxu0 0.0
  %996 = vmatpush1.msra.mxu0 0.0
  %997 = vmatprep.subr.mxu0 0.0
  %998 = vmatpush1.msra.mxu0 0.0
  %999 = vmatprep.subr.mxu0 0.0
  %1000 = vmatpush1.msra.mxu0 0.0
  %1001 = vmatprep.subr.mxu0 0.0
  %1002 = vmatpush1.msra.mxu0 0.0
  %1003 = vmatprep.subr.mxu0 0.0
  %1004 = vmatpush1.msra.mxu0 0.0
  %1005 = vmatprep.subr.mxu0 0.0
  %1006 = vmatpush1.msra.mxu0 0.0
  %1007 = vmatprep.subr.mxu0 0.0
  %1008 = vmatpush1.msra.mxu0 0.0
  %1009 = vmatprep.subr.mxu0 0.0
  %1010 = vmatpush1.msra.mxu0 0.0
  %1011 = vmatprep.subr.mxu0 0.0
  %1012 = vmatpush1.msra.mxu0 0.0
  %1013 = vmatprep.subr.mxu0 0.0
  %1014 = vmatpush1.msra.mxu0 0.0
  %1015 = vmatprep.subr.mxu0 0.0
  %1016 = vmatpush1.msra.mxu0 0.0
  %1017 = vmatprep.subr.mxu0 0.0
  %1018 = vmatpush1.msra.mxu0 0.0
  %1019 = vmatprep.subr.mxu0 0.0
  %1020 = vmatpush1.msra.mxu0 0.0
  %1021 = vmatprep.subr.mxu0 0.0
  %1022 = vmatpush1.msra.mxu0 0.0
  %1023 = vmatprep.subr.mxu0 0.0
  %1024 = vmatpush1.msra.mxu0 0.0
  %1025 = vmatprep.subr.mxu0 0.0
  %1026 = vmatpush1.msra.mxu0 0.0
  %1027 = vmatprep.subr.mxu0 0.0
  %1028 = vmatpush1.msra.mxu0 0.0
  %1029 = vmatprep.subr.mxu0 0.0
  %1030 = vmatpush1.msra.mxu0 0.0
  %1031 = vmatprep.subr.mxu0 0.0
  %1032 = vmatpush1.msra.mxu0 0.0
  %1033 = vmatprep.subr.mxu0 0.0
  %1034 = vmatpush1.msra.mxu0 0.0
  %1035 = vmatprep.subr.mxu0 0.0
  %1036 = vmatpush1.msra.mxu0 0.0
  %1037 = vmatprep.subr.mxu0 0.0
  %1038 = vmatpush1.msra.mxu0 0.0
  %1039 = vmatprep.subr.mxu0 0.0
  %1040 = vmatpush1.msra.mxu0 0.0
  %1041 = vmatprep.subr.mxu0 0.0
  %1042 = vmatpush1.msra.mxu0 0.0
  %1043 = vmatprep.subr.mxu0 0.0
  %1044 = vmatpush1.msra.mxu0 0.0
  %1045 = vmatprep.subr.mxu0 0.0
  %1046 = vmatpush1.msra.mxu0 0.0
  %1047 = vmatprep.subr.mxu0 0.0
  %1048 = vmatpush1.msra.mxu0 0.0
  %1049 = vmatprep.mubr.f32.mxu0 0.0
  %1050 = vmatmul.mubr.f32.gmra.mrb[0].mxu0 %v983
  %v1051 = vpop.f32.mrb[0].mxu0
  %v1052 = vadd.f32 %v979, %v1051
  %v1053 = vpop.f32.mrb[0].mxu0
  %1054 = vdwg.mxu0
  %1055 = vst.msk [vmem:[%s3] sm:$0xff] %vm25, %v1052
  // Predicated region
  $region14: #{lstm_net_forward.1} parent=0 // pred_check
    _
  $region15: #{lstm_net_forward.1} parent=0 // pred_check_branch
    %1057 = sbr.rel (0) target = $region17
  $region16: #{lstm_net_forward.1} parent=0 // pred_region
    _
  $region17: #{lstm_net_forward.1} parent=0 // pred_fallthru
    _
  // Predicated region
  $region18: #{lstm_net_forward.1} parent=0 // pred_check
    _
  $region19: #{lstm_net_forward.1} parent=0 // pred_check_branch
    %1059 = sbr.rel (0) target = $region21
  $region20: #{lstm_net_forward.1} parent=0 // pred_region
    _
  $region21: #{lstm_net_forward.1} parent=0 // pred_fallthru
    _

</llo_original>
